<compile_context>
chip_gen: v7x
topology: tpu7x:2x2x1
jax: 0.10.0
libtpu: 0.0.40
codegen_flags: <defaults>
</compile_context>

<pallas_src>
import functools

import jax
import jax.numpy as jnp
from jax.experimental import pallas as pl
from jax.experimental.pallas import tpu as pltpu

IN_FEATURES = 2
OUT_FEATURES = 4
DROPOUT_P = 0.5


def _model_kernel(xT_ref, w_ref, b_ref, bits_ref, o_ref, *,
                  training, p, keep_threshold):
    # Linear as VPU broadcast-FMAs (no MXU):
    #   yT[j, i] = W[j,0]*x[i,0] + W[j,1]*x[i,1] + b[j]
    w = w_ref[...]                                   # (OUT, IN)  f32
    b = b_ref[...]                                   # (OUT, 1)   f32
    yT = (w[:, 0:1] * xT_ref[0:1, :]
          + w[:, 1:2] * xT_ref[1:2, :]
          + b)                                       # (OUT, TILE_B) f32

    # ReLU (VPU)
    yT = jnp.maximum(yT, 0.0)

    # Dropout (training): pure integer threshold compare + select, inverted scaling.
    if training and p > 0.0:
        keep = bits_ref[...] < jnp.uint32(keep_threshold)
        yT = jnp.where(keep, yT * (1.0 / (1.0 - p)), 0.0)

    # log_softmax over features (sublane axis, 4 sublanes), numerically stable.
    m = jnp.max(yT, axis=0, keepdims=True)
    s = yT - m
    lse = jnp.log(jnp.sum(jnp.exp(s), axis=0, keepdims=True))
    o_ref[...] = (s - lse).astype(o_ref.dtype)


def _pick_batch_tile(B):
    # Lane-dim tile: multiple of 128 when possible, otherwise the full batch.
    if B >= 128:
        return min(512, (B // 128) * 128)
    return B


def model_forward(x, weight, bias, dropout_bits=None, *,
                  training=True, p=DROPOUT_P):
    """x: (B, IN) f32; weight: (OUT, IN) (torch nn.Linear layout); bias: (OUT,).
    dropout_bits: (OUT, B) uint32 random bits, required when training and p > 0."""
    B = x.shape[0]
    xT = x.T                                         # (IN, B): batch on lanes
    b_col = bias.reshape(OUT_FEATURES, 1)            # (OUT, 1)

    if training and p > 0.0:
        assert dropout_bits is not None and dropout_bits.shape == (OUT_FEATURES, B)
        bits = dropout_bits.astype(jnp.uint32)
    else:
        bits = jnp.zeros((OUT_FEATURES, B), jnp.uint32)   # unused in kernel

    keep_threshold = min(int(round((1.0 - p) * 4294967296.0)), 0xFFFFFFFF)

    tile_b = _pick_batch_tile(B)
    grid = (pl.cdiv(B, tile_b),)

    kernel = functools.partial(
        _model_kernel, training=training, p=p, keep_threshold=keep_threshold)

    outT = pl.pallas_call(
        kernel,
        out_shape=jax.ShapeDtypeStruct((OUT_FEATURES, B), jnp.float32),
        grid=grid,
        in_specs=[
            pl.BlockSpec((IN_FEATURES, tile_b), lambda i: (0, i)),        # x.T
            pl.BlockSpec((OUT_FEATURES, IN_FEATURES), lambda i: (0, 0)),  # W
            pl.BlockSpec((OUT_FEATURES, 1), lambda i: (0, 0)),            # b
            pl.BlockSpec((OUT_FEATURES, tile_b), lambda i: (0, i)),       # bits
        ],
        out_specs=pl.BlockSpec((OUT_FEATURES, tile_b), lambda i: (0, i)),
        compiler_params=pltpu.CompilerParams(
            dimension_semantics=("parallel",)),
    )(xT, weight, b_col, bits)

    return outT.T                                    # back to (B, OUT)


if __name__ == "__main__":
    key = jax.random.PRNGKey(0)
    kx, kw, kb, kd = jax.random.split(key, 4)

    # Deterministic parameter init (same shapes as nn.Linear(2, 4)).
    bound = 1.0 / (IN_FEATURES ** 0.5)
    weight = jax.random.uniform(
        kw, (OUT_FEATURES, IN_FEATURES), jnp.float32, -bound, bound)
    bias = jax.random.uniform(kb, (OUT_FEATURES,), jnp.float32, -bound, bound)

    # Input matches the module's example: torch.randn(2, 2)
    x = jax.random.normal(kx, (2, IN_FEATURES), jnp.float32)
    B = x.shape[0]

    # Dropout random bits, (OUT, B) to match the kernel's transposed layout.
    bits = jax.random.bits(kd, (OUT_FEATURES, B), dtype=jnp.uint32)

    out = model_forward(x, weight, bias, bits, training=True, p=DROPOUT_P)
    out = jax.block_until_ready(out)

    # Pure-JAX reference using the same dropout bits.
    keep_threshold = min(int(round((1.0 - DROPOUT_P) * 4294967296.0)), 0xFFFFFFFF)
    ref = x @ weight.T + bias[None, :]
    ref = jnp.maximum(ref, 0.0)
    keep = bits.T < jnp.uint32(keep_threshold)
    ref = jnp.where(keep, ref / (1.0 - DROPOUT_P), 0.0)
    ref = jax.nn.log_softmax(ref, axis=1)

    assert out.shape == (B, OUT_FEATURES)
    assert jnp.allclose(jnp.sum(jnp.exp(out), axis=1), 1.0, atol=1e-5)
    assert jnp.allclose(out, ref, atol=1e-5, rtol=1e-5)

    print("KERNEL_OK")
</pallas_src>

<mosaic_0001>
module attributes {stable_mosaic.version = 11 : i64} {
  func.func @_model_kernel(%arg0: i32, %arg1: memref<2x2xf32, #tpu.memory_space<vmem>>, %arg2: memref<4x2xf32, #tpu.memory_space<vmem>>, %arg3: memref<4x1xf32, #tpu.memory_space<vmem>>, %arg4: memref<4x2xi32, #tpu.memory_space<vmem>>, %arg5: memref<4x2xf32, #tpu.memory_space<vmem>>) attributes {dimension_semantics = [#tpu.dimension_semantics<parallel>], iteration_bounds = array<i64: 1>, scalar_prefetch = 0 : i64, scratch_operands = 0 : i64, tpu.core_type = #tpu.core_type<tc>, window_params = [{transform_indices = @transform_0, window_bounds = array<i64: 2, 2>}, {pipeline_mode = #tpu.pipeline_mode<synchronous>, transform_indices = @transform_1, window_bounds = array<i64: 4, 2>}, {pipeline_mode = #tpu.pipeline_mode<synchronous>, transform_indices = @transform_2, window_bounds = array<i64: 4, 1>}, {transform_indices = @transform_3, window_bounds = array<i64: 4, 2>}, {transform_indices = @transform_4, window_bounds = array<i64: 4, 2>}]} {
    %c0 = arith.constant 0 : index
    %c0_0 = arith.constant 0 : index
    %0 = vector.load %arg2[%c0, %c0_0] : memref<4x2xf32, #tpu.memory_space<vmem>>, vector<4x2xf32>
    %c0_1 = arith.constant 0 : index
    %c0_2 = arith.constant 0 : index
    %1 = vector.load %arg3[%c0_1, %c0_2] : memref<4x1xf32, #tpu.memory_space<vmem>>, vector<4x1xf32>
    %2 = vector.extract_strided_slice %0 {offsets = [0, 0], sizes = [4, 1], strides = [1, 1]} : vector<4x2xf32> to vector<4x1xf32>
    %c0_3 = arith.constant 0 : index
    %c0_4 = arith.constant 0 : index
    %3 = vector.load %arg1[%c0_3, %c0_4] : memref<2x2xf32, #tpu.memory_space<vmem>>, vector<1x2xf32>
    %4 = vector.broadcast %2 : vector<4x1xf32> to vector<4x2xf32>
    %5 = vector.broadcast %3 : vector<1x2xf32> to vector<4x2xf32>
    %6 = arith.mulf %4, %5 : vector<4x2xf32>
    %7 = vector.extract_strided_slice %0 {offsets = [0, 1], sizes = [4, 1], strides = [1, 1]} : vector<4x2xf32> to vector<4x1xf32>
    %c1 = arith.constant 1 : index
    %c0_5 = arith.constant 0 : index
    %8 = vector.load %arg1[%c1, %c0_5] : memref<2x2xf32, #tpu.memory_space<vmem>>, vector<1x2xf32>
    %9 = vector.broadcast %7 : vector<4x1xf32> to vector<4x2xf32>
    %10 = vector.broadcast %8 : vector<1x2xf32> to vector<4x2xf32>
    %11 = arith.mulf %9, %10 : vector<4x2xf32>
    %12 = arith.addf %6, %11 : vector<4x2xf32>
    %13 = vector.broadcast %1 : vector<4x1xf32> to vector<4x2xf32>
    %14 = arith.addf %12, %13 : vector<4x2xf32>
    %cst = arith.constant 0.000000e+00 : f32
    %15 = vector.broadcast %cst : f32 to vector<4x2xf32>
    %16 = arith.maximumf %14, %15 : vector<4x2xf32>
    %c0_6 = arith.constant 0 : index
    %c0_7 = arith.constant 0 : index
    %17 = vector.load %arg4[%c0_6, %c0_7] : memref<4x2xi32, #tpu.memory_space<vmem>>, vector<4x2xi32>
    %c-2147483648_i32 = arith.constant -2147483648 : i32
    %18 = vector.broadcast %c-2147483648_i32 : i32 to vector<4x2xi32>
    %19 = arith.cmpi ult, %17, %18 : vector<4x2xi32>
    %cst_8 = arith.constant 2.000000e+00 : f32
    %20 = vector.broadcast %cst_8 : f32 to vector<4x2xf32>
    %21 = arith.mulf %16, %20 : vector<4x2xf32>
    %cst_9 = arith.constant 0.000000e+00 : f32
    %22 = vector.broadcast %cst_9 : f32 to vector<4x2xf32>
    %23 = arith.select %19, %21, %22 : vector<4x2xi1>, vector<4x2xf32>
    %cst_10 = arith.constant dense<0xFF800000> : vector<2xf32>
    %24 = vector.multi_reduction <maximumf>, %23, %cst_10 [0] : vector<4x2xf32> to vector<2xf32>
    %25 = vector.shape_cast %24 : vector<2xf32> to vector<1x2xf32>
    %26 = vector.broadcast %25 : vector<1x2xf32> to vector<4x2xf32>
    %27 = arith.subf %23, %26 : vector<4x2xf32>
    %28 = math.exp %27 : vector<4x2xf32>
    %cst_11 = arith.constant dense<0.000000e+00> : vector<2xf32>
    %29 = vector.multi_reduction <add>, %28, %cst_11 [0] : vector<4x2xf32> to vector<2xf32>
    %30 = vector.shape_cast %29 : vector<2xf32> to vector<1x2xf32>
    %31 = math.log %30 : vector<1x2xf32>
    %32 = vector.broadcast %31 : vector<1x2xf32> to vector<4x2xf32>
    %33 = arith.subf %27, %32 : vector<4x2xf32>
    %c0_12 = arith.constant 0 : index
    %c0_13 = arith.constant 0 : index
    %34 = vector.load %arg5[%c0_12, %c0_13] : memref<4x2xf32, #tpu.memory_space<vmem>>, vector<4x2xf32>
    tpu.vector_store %arg5[%c0_12, %c0_13], %33 {strides = array<i32>} : memref<4x2xf32, #tpu.memory_space<vmem>>, vector<4x2xf32>,
    return
  }
  func.func @transform_0(%arg0: i32) -> (i32, i32) {
    %c0_i32 = arith.constant 0 : i32
    %c0_i32_0 = arith.constant 0 : i32
    return %c0_i32, %arg0 : i32, i32
  }
  func.func @transform_1(%arg0: i32) -> (i32, i32) {
    %c0_i32 = arith.constant 0 : i32
    %c0_i32_0 = arith.constant 0 : i32
    %c0_i32_1 = arith.constant 0 : i32
    return %c0_i32, %c0_i32_0 : i32, i32
  }
  func.func @transform_2(%arg0: i32) -> (i32, i32) {
    %c0_i32 = arith.constant 0 : i32
    %c0_i32_0 = arith.constant 0 : i32
    %c0_i32_1 = arith.constant 0 : i32
    return %c0_i32, %c0_i32_0 : i32, i32
  }
  func.func @transform_3(%arg0: i32) -> (i32, i32) {
    %c0_i32 = arith.constant 0 : i32
    %c0_i32_0 = arith.constant 0 : i32
    return %c0_i32, %arg0 : i32, i32
  }
  func.func @transform_4(%arg0: i32) -> (i32, i32) {
    %c0_i32 = arith.constant 0 : i32
    %c0_i32_0 = arith.constant 0 : i32
    return %c0_i32, %arg0 : i32, i32
  }
}

</mosaic_0001>

<llo_original>
// kernel: tpu_custom_call.1
$region0: #{tpu_custom_call.1}
  #allocation0 [shape = 'u32[]', space=smem, size = 0x4, offset = 0x4, fixed_abs, tag = 'smem constant byte address 0x4 - core index']
  #allocation1 [shape = 'u32[144,128]{1,0:T(1,128)}', space=vmem, size = 0x12000, scoped, tag = 'internal scratch']
  %s0 = inlined_call_operand.vmem [shape: f32[2,2], index: 0, kind: input, shape index: {}]
  %s1 = inlined_call_operand.vmem [shape: f32[4,2], index: 1, kind: input, shape index: {}]
  %s2 = inlined_call_operand.vmem [shape: f32[4,1], index: 2, kind: input, shape index: {}]
  %s3 = inlined_call_operand.vmem [shape: u32[4,2], index: 3, kind: input, shape index: {}]
  %s4 = inlined_call_operand.vmem [shape: f32[4,2], index: 4, kind: output, shape index: {}]
  %s5 = sld [smem:[#allocation0]]
  $region26: #{tpu_custom_call.1} parent=0
    _
  %s7 = ssub.s32 1, %s5
  %s8 = scalar_select 0, %s7, %s5
  // Predicated region
  $region2: #{tpu_custom_call.1} parent=0 // pred_check
    _
  $region3: #{tpu_custom_call.1} parent=0 // pred_check_branch
    %10 = sbr.rel (0) target = $region5
  $region4: #{tpu_custom_call.1} parent=0 // pred_region
    _
  $region5: #{tpu_custom_call.1} parent=0 // pred_fallthru
    _
  // Predicated region
  $region6: #{tpu_custom_call.1} parent=0 // pred_check
    _
  $region7: #{tpu_custom_call.1} parent=0 // pred_check_branch
    %12 = sbr.rel (0) target = $region9
  $region8: #{tpu_custom_call.1} parent=0 // pred_region
    _
  $region9: #{tpu_custom_call.1} parent=0 // pred_fallthru
    _
  // Predicated region
  $region10: #{tpu_custom_call.1} parent=0 // pred_check
    _
  $region11: #{tpu_custom_call.1} parent=0 // pred_check_branch
    %14 = sbr.rel (0) target = $region13
  $region12: #{tpu_custom_call.1} parent=0 // pred_region
    _
  $region13: #{tpu_custom_call.1} parent=0 // pred_fallthru
    _
  // Predicated region
  $region14: #{tpu_custom_call.1} parent=0 // pred_check
    _
  $region15: #{tpu_custom_call.1} parent=0 // pred_check_branch
    %16 = sbr.rel (0) target = $region17
  $region16: #{tpu_custom_call.1} parent=0 // pred_region
    _
  $region17: #{tpu_custom_call.1} parent=0 // pred_fallthru
    _
  %v17 = vld [vmem:[%s1] sm:$0xf]
  %v18 = vld [vmem:[%s2] sm:$0xf]
  %v19 = vld [vmem:[%s0] sm:$0x1]
  %21 = vset.pattern.permute.xlu0 0
  %22 = vperm.xlu0 %21, %v17
  %v23 = vpop.permute.xlu0 %22
  %v25 = vlaneseq
  %v26 = vshrl.u32 %v25, 7
  %v27 = vsub.s32 0, %v26
  %v28 = vrot.slane %v19, %v27
  %v29 = vmul.f32 %v23, %v28
  %v30 = vld [vmem:[%s0 + $0x1] sm:$0x1]
  %31 = vset.pattern.permute.xlu0 1
  %32 = vperm.xlu0 %31, %v17
  %v33 = vpop.permute.xlu0 %32
  %v35 = vlaneseq
  %v36 = vshrl.u32 %v35, 7
  %v37 = vsub.s32 0, %v36
  %v38 = vrot.slane %v30, %v37
  %v39 = vmul.f32 %v33, %v38
  %v40 = vadd.f32 %v29, %v39
  %42 = vset.pattern.permute.xlu0 0
  %43 = vperm.xlu0 %42, %v18
  %v44 = vpop.permute.xlu0 %43
  %v46 = vadd.f32 %v40, %v44
  %v47 = vmax.f32 %v46, 0.0
  %v48 = vld [vmem:[%s3] sm:$0xf]
  %vm49 = vcmp.lt.u32.totalorder %v48, 2147483648
  %v50 = vmul.f32 %v47, 2.0
  %v51 = vsel %vm49, %v50, 0.0
  %vm52 = vcmask 11264
  %v53 = vsel %vm52, %v51, -inf
  %v54 = vrot.slane %v53, 4
  %v55 = vmax.f32 %v53, %v54
  %v56 = vrot.slane %v55, 2
  %v57 = vmax.f32 %v55, %v56
  %v58 = vrot.slane %v57, 1
  %v59 = vmax.f32 %v57, %v58
  %v60 = vsub.f32 %v51, %v59
  %v61 = vmul.f32 %v60, 1.442695
  %v62 = vpow.pop %v61
  %v63 = vsel %vm52, %v62, 0.0
  %v64 = vrot.slane %v63, 4
  %v65 = vadd.f32 %v63, %v64
  %v66 = vrot.slane %v65, 2
  %v67 = vadd.f32 %v65, %v66
  %v68 = vrot.slane %v67, 1
  %v69 = vadd.f32 %v67, %v68
  %v70 = vlog2.pop %v69
  %v71 = vmul.f32 %v70, 0.6931472
  %v72 = vsub.f32 %v60, %v71
  %73 = vst.msk [vmem:[%s4] sm:$0xf] %vm52, %v72
  // Predicated region
  $region18: #{tpu_custom_call.1} parent=0 // pred_check
    _
  $region19: #{tpu_custom_call.1} parent=0 // pred_check_branch
    %75 = sbr.rel (0) target = $region21
  $region20: #{tpu_custom_call.1} parent=0 // pred_region
    _
  $region21: #{tpu_custom_call.1} parent=0 // pred_fallthru
    _
  // Predicated region
  $region22: #{tpu_custom_call.1} parent=0 // pred_check
    _
  $region23: #{tpu_custom_call.1} parent=0 // pred_check_branch
    %77 = sbr.rel (0) target = $region25
  $region24: #{tpu_custom_call.1} parent=0 // pred_region
    _
  $region25: #{tpu_custom_call.1} parent=0 // pred_fallthru
    _

</llo_original>
